<compile_context>
chip_gen: v6e
topology: v6e:2x2x1
jax: 0.10.0
libtpu: 0.0.40
codegen_flags: <defaults>
</compile_context>

<pallas_src>
import jax
import jax.numpy as jnp
from jax.experimental import pallas as pl
from jax.experimental.pallas import tpu as pltpu


def gru_context_kernel(lens_ref, x_ref, w_ih_ref, w_hh_ref, b_ih_ref, b_hh_ref,
                       hids_ref, enc_ref, h_scr):
    """One (batch-tile, time-step) grid point of the length-masked GRU."""
    t = pl.program_id(1)

    @pl.when(t == 0)
    def _init():
        h_scr[...] = jnp.zeros_like(h_scr)

    h_prev = h_scr[...]                       # [TB, H] f32 carried hidden state
    x_t = x_ref[0]                            # [TB, D] f32 current time step
    H = h_prev.shape[-1]

    # Fused gate projections: a single MXU matmul per operand (r|z|n stacked).
    gi = jnp.dot(x_t, w_ih_ref[...], preferred_element_type=jnp.float32) + b_ih_ref[...]
    gh = jnp.dot(h_prev, w_hh_ref[...], preferred_element_type=jnp.float32) + b_hh_ref[...]

    i_r, i_z, i_n = gi[:, 0:H], gi[:, H:2 * H], gi[:, 2 * H:3 * H]
    h_r, h_z, h_n = gh[:, 0:H], gh[:, H:2 * H], gh[:, 2 * H:3 * H]

    r = jax.nn.sigmoid(i_r + h_r)
    z = jax.nn.sigmoid(i_z + h_z)
    n = jnp.tanh(i_n + r * h_n)
    h_new = (1.0 - z) * n + z * h_prev

    # Length masking (replaces pack_padded_sequence): rows with t >= len keep
    # their previous hidden state; emitted hids past the length are zero
    # (pad_packed_sequence pads with zeros).
    valid = (t < lens_ref[...]).astype(jnp.float32)          # [TB, 1]
    h_next = valid * h_new + (1.0 - valid) * h_prev
    h_scr[...] = h_next
    hids_ref[0] = (valid * h_new).astype(hids_ref.dtype)

    @pl.when(t == pl.num_programs(1) - 1)
    def _finalize():
        enc_ref[...] = h_next.astype(enc_ref.dtype)          # == h_n of the GRU


def context_encoder_forward(utt_encs, floors, context_lens, params, *, training=False):
    """ContextEncoder forward (GRU part in Pallas).

    utt_encs:     [B, T, E] f32   output of the external utt_encoder
    floors:       [B, T]    int32 speaker-floor ids in {0, 1}
    context_lens: [B]       int32 number of valid utterances per dialogue
    params: w_ih [D, 3H], w_hh [H, 3H], b_ih [1, 3H], b_hh [1, 3H]  (D = E + 2)
    Returns (enc [B, H], hids [B, T, H]).
    """
    B, T, E = utt_encs.shape
    H = params["w_hh"].shape[0]
    D = E + 2

    floor_one_hot = jax.nn.one_hot(floors, 2, dtype=jnp.float32)      # [B, T, 2]
    x = jnp.concatenate([utt_encs.astype(jnp.float32), floor_one_hot], axis=-1)
    # TODO(synk): training-mode dropout(p=0.25) on x; inference path is identity.

    # Time-major layout: each grid step streams a lane-dense [TB, D] slab.
    x_tm = jnp.transpose(x, (1, 0, 2))                                # [T, B, D]
    lens2d = context_lens.astype(jnp.int32).reshape(B, 1)

    # Batch tile: full batch when small, otherwise 256-row tiles.
    TB = B if (B <= 256 or B % 256 != 0) else 256
    n_btiles = B // TB

    # VMEM budget from the actual tile footprint ((8,128)-padded, 4B/elem):
    def padded(r, c):
        return (-(-r // 8) * 8) * (-(-c // 128) * 128)
    est_bytes = 4 * (
        2 * (padded(TB, D) + padded(TB, H) + padded(TB, 1))           # double-buffered x, hids, lens
        + padded(TB, H)                                               # enc (resident)
        + padded(D, 3 * H) + padded(H, 3 * H) + 2 * padded(1, 3 * H)  # resident weights/biases
        + padded(TB, H)                                               # hidden-state scratch
    )
    vmem_limit = min(32 << 20, max(8 << 20, 4 * est_bytes))

    out_shape = (
        jax.ShapeDtypeStruct((T, B, H), jnp.float32),   # hids (time-major slab)
        jax.ShapeDtypeStruct((B, H), jnp.float32),      # enc
    )

    hids_tm, enc = pl.pallas_call(
        gru_context_kernel,
        out_shape=out_shape,
        grid=(n_btiles, T),
        in_specs=[
            pl.BlockSpec((TB, 1), lambda i, t: (i, 0)),          # context lens
            pl.BlockSpec((1, TB, D), lambda i, t: (t, i, 0)),    # x, time-major
            pl.BlockSpec((D, 3 * H), lambda i, t: (0, 0)),       # W_ih (resident)
            pl.BlockSpec((H, 3 * H), lambda i, t: (0, 0)),       # W_hh (resident)
            pl.BlockSpec((1, 3 * H), lambda i, t: (0, 0)),       # b_ih (resident)
            pl.BlockSpec((1, 3 * H), lambda i, t: (0, 0)),       # b_hh (resident)
        ],
        out_specs=(
            pl.BlockSpec((1, TB, H), lambda i, t: (t, i, 0)),    # hids
            pl.BlockSpec((TB, H), lambda i, t: (i, 0)),          # enc (resident over t)
        ),
        scratch_shapes=[pltpu.VMEM((TB, H), jnp.float32)],
        compiler_params=pltpu.CompilerParams(
            dimension_semantics=("parallel", "arbitrary"),
            vmem_limit_bytes=vmem_limit,
        ),
    )(lens2d, x_tm, params["w_ih"], params["w_hh"], params["b_ih"], params["b_hh"])

    hids = jnp.transpose(hids_tm, (1, 0, 2))                      # [B, T, H]
    return enc, hids


def init_context_encoder_params(key, input_size, hidden_size):
    """GRU params: orthogonal weights (matching init_weights), stored [in, out]
    with the three gates (r, z, n) fused along the output dimension."""
    k_ih, k_hh, k_bi, k_bh = jax.random.split(key, 4)
    ortho = jax.nn.initializers.orthogonal()
    bound = 1.0 / (hidden_size ** 0.5)
    return {
        "w_ih": ortho(k_ih, (input_size, 3 * hidden_size), jnp.float32),
        "w_hh": ortho(k_hh, (hidden_size, 3 * hidden_size), jnp.float32),
        "b_ih": jax.random.uniform(k_bi, (1, 3 * hidden_size), jnp.float32, -bound, bound),
        "b_hh": jax.random.uniform(k_bh, (1, 3 * hidden_size), jnp.float32, -bound, bound),
    }


def _gru_reference(x, lens, params):
    """Pure-JAX length-masked GRU (same semantics as pack/pad + index_select)."""
    B, T, D = x.shape
    H = params["w_hh"].shape[0]
    h = jnp.zeros((B, H), jnp.float32)
    hids = []
    for t in range(T):
        gi = x[:, t, :] @ params["w_ih"] + params["b_ih"]
        gh = h @ params["w_hh"] + params["b_hh"]
        i_r, i_z, i_n = jnp.split(gi, 3, axis=-1)
        h_r, h_z, h_n = jnp.split(gh, 3, axis=-1)
        r = jax.nn.sigmoid(i_r + h_r)
        z = jax.nn.sigmoid(i_z + h_z)
        n = jnp.tanh(i_n + r * h_n)
        h_new = (1.0 - z) * n + z * h
        valid = (t < lens)[:, None].astype(jnp.float32)
        h = valid * h_new + (1.0 - valid) * h
        hids.append(valid * h_new)
    return h, jnp.stack(hids, axis=1)


if __name__ == "__main__":
    key = jax.random.PRNGKey(0)
    k_enc, k_floor, k_par = jax.random.split(key, 3)

    batch, max_context_len, utt_enc_size, hidden_size = 4, 8, 30, 32
    input_size = utt_enc_size + 2   # +2 for the floor one-hot, as in the module

    utt_encs = jax.random.normal(
        k_enc, (batch, max_context_len, utt_enc_size), jnp.float32)
    floors = jax.random.bernoulli(
        k_floor, 0.5, (batch, max_context_len)).astype(jnp.int32)
    context_lens = jnp.array([8, 5, 3, 6], jnp.int32)
    params = init_context_encoder_params(k_par, input_size, hidden_size)

    enc, hids = context_encoder_forward(utt_encs, floors, context_lens, params)
    jax.block_until_ready((enc, hids))

    # Reference check in plain JAX (same masked-GRU math).
    floor_one_hot = jax.nn.one_hot(floors, 2, dtype=jnp.float32)
    x = jnp.concatenate([utt_encs, floor_one_hot], axis=-1)
    enc_ref, hids_ref = _gru_reference(x, context_lens, params)

    assert jnp.allclose(enc, enc_ref, atol=1e-5), float(jnp.max(jnp.abs(enc - enc_ref)))
    assert jnp.allclose(hids, hids_ref, atol=1e-5), float(jnp.max(jnp.abs(hids - hids_ref)))

    print("KERNEL_OK")
</pallas_src>

<mosaic_0001>
module attributes {stable_mosaic.version = 11 : i64} {
  func.func @gru_context_kernel(%arg0: i32, %arg1: i32, %arg2: memref<4x1xi32, #tpu.memory_space<vmem>>, %arg3: memref<1x4x32xf32, #tpu.memory_space<vmem>>, %arg4: memref<32x96xf32, #tpu.memory_space<vmem>>, %arg5: memref<32x96xf32, #tpu.memory_space<vmem>>, %arg6: memref<1x96xf32, #tpu.memory_space<vmem>>, %arg7: memref<1x96xf32, #tpu.memory_space<vmem>>, %arg8: memref<1x4x32xf32, #tpu.memory_space<vmem>>, %arg9: memref<4x32xf32, #tpu.memory_space<vmem>>, %arg10: memref<4x32xf32, #tpu.memory_space<vmem>>) attributes {dimension_semantics = [#tpu.dimension_semantics<parallel>, #tpu.dimension_semantics<arbitrary>], iteration_bounds = array<i64: 1, 8>, scalar_prefetch = 0 : i64, scratch_operands = 1 : i64, tpu.core_type = #tpu.core_type<tc>, window_params = [{transform_indices = @transform_0, window_bounds = array<i64: 4, 1>}, {transform_indices = @transform_1, window_bounds = array<i64: 1, 4, 32>}, {pipeline_mode = #tpu.pipeline_mode<synchronous>, transform_indices = @transform_2, window_bounds = array<i64: 32, 96>}, {pipeline_mode = #tpu.pipeline_mode<synchronous>, transform_indices = @transform_3, window_bounds = array<i64: 32, 96>}, {pipeline_mode = #tpu.pipeline_mode<synchronous>, transform_indices = @transform_4, window_bounds = array<i64: 1, 96>}, {pipeline_mode = #tpu.pipeline_mode<synchronous>, transform_indices = @transform_5, window_bounds = array<i64: 1, 96>}, {transform_indices = @transform_6, window_bounds = array<i64: 1, 4, 32>}, {transform_indices = @transform_7, window_bounds = array<i64: 4, 32>}]} {
    %c0_i32 = arith.constant 0 : i32
    %0 = arith.cmpi eq, %arg1, %c0_i32 : i32
    %1 = arith.extui %0 : i1 to i32
    %c0_i32_0 = arith.constant 0 : i32
    %2 = arith.cmpi ne, %1, %c0_i32_0 : i32
    scf.if %2 {
      %cst_26 = arith.constant 0.000000e+00 : f32
      %63 = vector.broadcast %cst_26 : f32 to vector<4x32xf32>
      %c0_27 = arith.constant 0 : index
      %c0_28 = arith.constant 0 : index
      %64 = vector.load %arg10[%c0_27, %c0_28] : memref<4x32xf32, #tpu.memory_space<vmem>>, vector<4x32xf32>
      tpu.vector_store %arg10[%c0_27, %c0_28], %63 {strides = array<i32>} : memref<4x32xf32, #tpu.memory_space<vmem>>, vector<4x32xf32>,
    } else {
    }
    %c0 = arith.constant 0 : index
    %c0_1 = arith.constant 0 : index
    %3 = vector.load %arg10[%c0, %c0_1] : memref<4x32xf32, #tpu.memory_space<vmem>>, vector<4x32xf32>
    %c0_2 = arith.constant 0 : index
    %c0_3 = arith.constant 0 : index
    %c0_4 = arith.constant 0 : index
    %4 = vector.load %arg3[%c0_2, %c0_3, %c0_4] : memref<1x4x32xf32, #tpu.memory_space<vmem>>, vector<1x4x32xf32>
    %5 = vector.shape_cast %4 : vector<1x4x32xf32> to vector<4x32xf32>
    %c0_5 = arith.constant 0 : index
    %c0_6 = arith.constant 0 : index
    %6 = vector.load %arg4[%c0_5, %c0_6] : memref<32x96xf32, #tpu.memory_space<vmem>>, vector<32x96xf32>
    %cst = arith.constant dense<0.000000e+00> : vector<4x96xf32>
    %7 = tpu.matmul %5, %6, %cst {dimension_numbers = #tpu.dot_dimension_numbers<[1], [0], [0], [1], [0, 0, 1, 1], [], []>} : vector<4x32xf32>, vector<32x96xf32>, vector<4x96xf32> -> vector<4x96xf32>
    %c0_7 = arith.constant 0 : index
    %c0_8 = arith.constant 0 : index
    %8 = vector.load %arg6[%c0_7, %c0_8] : memref<1x96xf32, #tpu.memory_space<vmem>>, vector<1x96xf32>
    %9 = vector.broadcast %8 : vector<1x96xf32> to vector<4x96xf32>
    %10 = arith.addf %7, %9 : vector<4x96xf32>
    %c0_9 = arith.constant 0 : index
    %c0_10 = arith.constant 0 : index
    %11 = vector.load %arg5[%c0_9, %c0_10] : memref<32x96xf32, #tpu.memory_space<vmem>>, vector<32x96xf32>
    %cst_11 = arith.constant dense<0.000000e+00> : vector<4x96xf32>
    %12 = tpu.matmul %3, %11, %cst_11 {dimension_numbers = #tpu.dot_dimension_numbers<[1], [0], [0], [1], [0, 0, 1, 1], [], []>} : vector<4x32xf32>, vector<32x96xf32>, vector<4x96xf32> -> vector<4x96xf32>
    %c0_12 = arith.constant 0 : index
    %c0_13 = arith.constant 0 : index
    %13 = vector.load %arg7[%c0_12, %c0_13] : memref<1x96xf32, #tpu.memory_space<vmem>>, vector<1x96xf32>
    %14 = vector.broadcast %13 : vector<1x96xf32> to vector<4x96xf32>
    %15 = arith.addf %12, %14 : vector<4x96xf32>
    %16 = vector.extract_strided_slice %10 {offsets = [0, 0], sizes = [4, 32], strides = [1, 1]} : vector<4x96xf32> to vector<4x32xf32>
    %17 = vector.extract_strided_slice %10 {offsets = [0, 32], sizes = [4, 32], strides = [1, 1]} : vector<4x96xf32> to vector<4x32xf32>
    %18 = vector.extract_strided_slice %10 {offsets = [0, 64], sizes = [4, 32], strides = [1, 1]} : vector<4x96xf32> to vector<4x32xf32>
    %19 = vector.extract_strided_slice %15 {offsets = [0, 0], sizes = [4, 32], strides = [1, 1]} : vector<4x96xf32> to vector<4x32xf32>
    %20 = vector.extract_strided_slice %15 {offsets = [0, 32], sizes = [4, 32], strides = [1, 1]} : vector<4x96xf32> to vector<4x32xf32>
    %21 = vector.extract_strided_slice %15 {offsets = [0, 64], sizes = [4, 32], strides = [1, 1]} : vector<4x96xf32> to vector<4x32xf32>
    %22 = arith.addf %16, %19 : vector<4x32xf32>
    %23 = arith.negf %22 : vector<4x32xf32>
    %24 = math.exp %23 : vector<4x32xf32>
    %cst_14 = arith.constant 1.000000e+00 : f32
    %25 = vector.broadcast %cst_14 : f32 to vector<4x32xf32>
    %26 = arith.addf %25, %24 : vector<4x32xf32>
    %27 = arith.divf %25, %26 : vector<4x32xf32>
    %28 = arith.addf %17, %20 : vector<4x32xf32>
    %29 = arith.negf %28 : vector<4x32xf32>
    %30 = math.exp %29 : vector<4x32xf32>
    %cst_15 = arith.constant 1.000000e+00 : f32
    %31 = vector.broadcast %cst_15 : f32 to vector<4x32xf32>
    %32 = arith.addf %31, %30 : vector<4x32xf32>
    %33 = arith.divf %31, %32 : vector<4x32xf32>
    %34 = arith.mulf %27, %21 : vector<4x32xf32>
    %35 = arith.addf %18, %34 : vector<4x32xf32>
    %36 = math.tanh %35 : vector<4x32xf32>
    %cst_16 = arith.constant 1.000000e+00 : f32
    %37 = vector.broadcast %cst_16 : f32 to vector<4x32xf32>
    %38 = arith.subf %37, %33 : vector<4x32xf32>
    %39 = arith.mulf %38, %36 : vector<4x32xf32>
    %40 = arith.mulf %33, %3 : vector<4x32xf32>
    %41 = arith.addf %39, %40 : vector<4x32xf32>
    %c0_17 = arith.constant 0 : index
    %c0_18 = arith.constant 0 : index
    %42 = vector.load %arg2[%c0_17, %c0_18] : memref<4x1xi32, #tpu.memory_space<vmem>>, vector<4x1xi32>
    %43 = vector.broadcast %arg1 : i32 to vector<4x1xi32>
    %44 = arith.cmpi slt, %43, %42 : vector<4x1xi32>
    %45 = arith.extui %44 : vector<4x1xi1> to vector<4x1xi32>
    %46 = arith.sitofp %45 : vector<4x1xi32> to vector<4x1xf32>
    %47 = vector.broadcast %46 : vector<4x1xf32> to vector<4x32xf32>
    %48 = arith.mulf %47, %41 : vector<4x32xf32>
    %cst_19 = arith.constant 1.000000e+00 : f32
    %49 = vector.broadcast %cst_19 : f32 to vector<4x1xf32>
    %50 = arith.subf %49, %46 : vector<4x1xf32>
    %51 = vector.broadcast %50 : vector<4x1xf32> to vector<4x32xf32>
    %52 = arith.mulf %51, %3 : vector<4x32xf32>
    %53 = arith.addf %48, %52 : vector<4x32xf32>
    %c0_20 = arith.constant 0 : index
    %c0_21 = arith.constant 0 : index
    %54 = vector.load %arg10[%c0_20, %c0_21] : memref<4x32xf32, #tpu.memory_space<vmem>>, vector<4x32xf32>
    tpu.vector_store %arg10[%c0_20, %c0_21], %53 {strides = array<i32>} : memref<4x32xf32, #tpu.memory_space<vmem>>, vector<4x32xf32>,
    %55 = vector.broadcast %46 : vector<4x1xf32> to vector<4x32xf32>
    %56 = arith.mulf %55, %41 : vector<4x32xf32>
    %c0_22 = arith.constant 0 : index
    %c0_23 = arith.constant 0 : index
    %c0_24 = arith.constant 0 : index
    %57 = vector.load %arg8[%c0_22, %c0_23, %c0_24] : memref<1x4x32xf32, #tpu.memory_space<vmem>>, vector<1x4x32xf32>
    %58 = vector.shape_cast %57 : vector<1x4x32xf32> to vector<4x32xf32>
    %59 = vector.shape_cast %56 : vector<4x32xf32> to vector<1x4x32xf32>
    tpu.vector_store %arg8[%c0_22, %c0_23, %c0_24], %59 {strides = array<i32>} : memref<1x4x32xf32, #tpu.memory_space<vmem>>, vector<1x4x32xf32>,
    %c7_i32 = arith.constant 7 : i32
    %60 = arith.cmpi eq, %arg1, %c7_i32 : i32
    %61 = arith.extui %60 : i1 to i32
    %c0_i32_25 = arith.constant 0 : i32
    %62 = arith.cmpi ne, %61, %c0_i32_25 : i32
    scf.if %62 {
      %c0_26 = arith.constant 0 : index
      %c0_27 = arith.constant 0 : index
      %63 = vector.load %arg9[%c0_26, %c0_27] : memref<4x32xf32, #tpu.memory_space<vmem>>, vector<4x32xf32>
      tpu.vector_store %arg9[%c0_26, %c0_27], %53 {strides = array<i32>} : memref<4x32xf32, #tpu.memory_space<vmem>>, vector<4x32xf32>,
    } else {
    }
    return
  }
  func.func @transform_0(%arg0: i32, %arg1: i32) -> (i32, i32) {
    %c0_i32 = arith.constant 0 : i32
    %c0_i32_0 = arith.constant 0 : i32
    return %arg0, %c0_i32 : i32, i32
  }
  func.func @transform_1(%arg0: i32, %arg1: i32) -> (i32, i32, i32) {
    %c0_i32 = arith.constant 0 : i32
    %c0_i32_0 = arith.constant 0 : i32
    return %arg1, %arg0, %c0_i32 : i32, i32, i32
  }
  func.func @transform_2(%arg0: i32, %arg1: i32) -> (i32, i32) {
    %c0_i32 = arith.constant 0 : i32
    %c0_i32_0 = arith.constant 0 : i32
    %c0_i32_1 = arith.constant 0 : i32
    return %c0_i32, %c0_i32_0 : i32, i32
  }
  func.func @transform_3(%arg0: i32, %arg1: i32) -> (i32, i32) {
    %c0_i32 = arith.constant 0 : i32
    %c0_i32_0 = arith.constant 0 : i32
    %c0_i32_1 = arith.constant 0 : i32
    return %c0_i32, %c0_i32_0 : i32, i32
  }
  func.func @transform_4(%arg0: i32, %arg1: i32) -> (i32, i32) {
    %c0_i32 = arith.constant 0 : i32
    %c0_i32_0 = arith.constant 0 : i32
    %c0_i32_1 = arith.constant 0 : i32
    return %c0_i32, %c0_i32_0 : i32, i32
  }
  func.func @transform_5(%arg0: i32, %arg1: i32) -> (i32, i32) {
    %c0_i32 = arith.constant 0 : i32
    %c0_i32_0 = arith.constant 0 : i32
    %c0_i32_1 = arith.constant 0 : i32
    return %c0_i32, %c0_i32_0 : i32, i32
  }
  func.func @transform_6(%arg0: i32, %arg1: i32) -> (i32, i32, i32) {
    %c0_i32 = arith.constant 0 : i32
    %c0_i32_0 = arith.constant 0 : i32
    return %arg1, %arg0, %c0_i32 : i32, i32, i32
  }
  func.func @transform_7(%arg0: i32, %arg1: i32) -> (i32, i32) {
    %c0_i32 = arith.constant 0 : i32
    %c0_i32_0 = arith.constant 0 : i32
    return %arg0, %c0_i32 : i32, i32
  }
}

</mosaic_0001>

<llo_original>
// kernel: tpu_custom_call.1
$region0: #{tpu_custom_call.1}
  #allocation0 [shape = 'u32[]', space=smem, size = 0x4, offset = 0x4, fixed_abs, tag = 'smem constant byte address 0x4 - core index']
  #allocation1 [shape = 'u32[144,128]{1,0:T(1,128)}', space=vmem, size = 0x12000, scoped, tag = 'internal scratch']
  #allocation2 [shape = 'f32[4,32]{1,0:T(4,128)}', space=vmem, size = 0x800, scoped, tag = 'scratch operand']
  %s0 = inlined_call_operand.vmem [shape: s32[4,1], index: 0, kind: input, shape index: {}]
  %s1 = inlined_call_operand.hbm [shape: f32[8,4,32], index: 1, kind: input, shape index: {}]
  %s2 = inlined_call_operand.hbm [shape: f32[32,96], index: 2, kind: input, shape index: {}]
  %s3 = inlined_call_operand.hbm [shape: f32[32,96], index: 3, kind: input, shape index: {}]
  %s4 = inlined_call_operand.vmem [shape: f32[1,96], index: 4, kind: input, shape index: {}]
  %s5 = inlined_call_operand.vmem [shape: f32[1,96], index: 5, kind: input, shape index: {}]
  %s6 = inlined_call_operand.hbm [shape: f32[8,4,32], index: 6, kind: output, shape index: {0}]
  %s7 = inlined_call_operand.hbm [shape: f32[4,32], index: 7, kind: output, shape index: {1}]
  %8 = xla_tuple %s6, %s7
  %s9 = sld [smem:[#allocation0]]
  $region85: #{tpu_custom_call.1} parent=0
    _
  %s11 = ssub.s32 1, %s9
  %s12 = scalar_select 0, %s11, %s9
  $region1: #{tpu_custom_call.1} parent=0
    #allocation3 [shape = 'u8[4096]{0}', space=vmem, size = 0x1000, scoped, tag = 'input window, operand 1']
    #allocation4 [shape = 's32[2]{0}', space=sflag, size = 0x8, scoped, tag = 'scoped memory for tpu_custom_call.1']
    #allocation5 [shape = 's32[2]{0}', space=sflag, size = 0x8, scoped, tag = 'scoped memory for tpu_custom_call.1']
    #allocation6 [shape = 'u8[16384]{0}', space=vmem, size = 0x4000, scoped, tag = 'input window, operand 2, single buffered']
    #allocation7 [shape = 's32[1]{0}', space=sflag, size = 0x4, scoped, tag = 'scoped memory for tpu_custom_call.1']
    #allocation8 [shape = 'u8[16384]{0}', space=vmem, size = 0x4000, scoped, tag = 'input window, operand 3, single buffered']
    #allocation9 [shape = 'u8[4096]{0}', space=vmem, size = 0x1000, scoped, tag = 'output window, operand 0']
    #allocation10 [shape = 'u8[2048]{0}', space=vmem, size = 0x800, scoped, tag = 'output window, operand 1, single buffered']
    #allocation11 [shape = 's32[1]{0}', space=sflag, size = 0x4, scoped, tag = 'scoped memory for tpu_custom_call.1']
    %13 = vsyncpa [#allocation4], 0
    %s14 = scalar_lea.sflag [#allocation4], 1
    %15 = vsyncpa %s14, 0
    %16 = vsyncpa [#allocation7], 0
    %17 = vsyncpa [#allocation5], 0
    %s18 = scalar_lea.sflag [#allocation5], 1
    %19 = vsyncpa %s18, 0
    %20 = vsyncpa [#allocation11], 0
    loop: start=0, step=1, limit=10
    $region2: #{tpu_custom_call.1} parent=1 // loop_pre_header
      _
    $region3: #{tpu_custom_call.1} parent=1 // loop_header
      %s22 = sphi 0, %s26
      %p23 = scmp.ge.s32.totalorder %s22, 10
      %s29 = sphi 0, %s41
      %s30 = sphi 0, %s37
      %s31 = sphi 0, %s29
      %s32 = sphi 0, %s30
      %s33 = sphi 0, %s31
      %s34 = sphi 0, %s32
      %s44 = sphi 0, %s46
      %s47 = sphi 0, %s44
      %s48 = sphi 0, %s47
      %s64 = sphi 0, %s48
      %s72 = sphi 0, %s74
      %s75 = sphi 0, %s72
      %s76 = sphi 0, %s75
      %s92 = sphi 0, %s76
      %s96 = sphi 0, %s96
      %s98 = sphi 0, %s96
      %s99 = sphi 0, %s98
      %s113 = sphi 0, %s99
      %s117 = sphi 0, %s117
      %s119 = sphi 0, %s117
      %s120 = sphi 0, %s119
      %s134 = sphi 0, %s120
      %s138 = sphi 0, %s138
      %s140 = sphi 0, %s138
      %s141 = sphi 0, %s140
      %s155 = sphi 0, %s141
      %s159 = sphi 0, %s159
      %s161 = sphi 0, %s159
      %s162 = sphi 0, %s161
      %s176 = sphi 0, %s162
      %s184 = sphi 0, %s186
      %s187 = sphi 0, %s184
      %s188 = sphi 0, %s187
      %s204 = sphi 0, %s188
      %s210 = sphi 0, %s212
      %s213 = sphi 0, %s210
      %s214 = sphi 0, %s213
      %s230 = sphi 0, %s214
    $region4: #{tpu_custom_call.1} parent=1 // loop_header_branch
      %25 = sbr.rel (%p23) target = $region8
    $region5: #{tpu_custom_call.1} parent=1 // loop_body
      %s27 = ssub.s32 %s22, 1
      %s28 = ssub.s32 %s22, 2
      %s35 = sadd.s32 1, %s30
      %p36 = scmp.ge.s32.totalorder %s35, 8
      %s37 = scalar_select %p36, 0, %s35
      %s38 = sadd.s32 1, %s29
      %s39 = scalar_select %p36, %s38, %s29
      %p40 = scmp.ge.s32.totalorder %s39, 1
      %s41 = scalar_select %p40, 0, %s39
      %s42 = ssub.s32 %s29, %s41
      %p43 = scmp.eq.s32.totalorder %s42, 0
      %s45 = sadd.s32 %s44, 1
      %s46 = scalar_select %p43, %s44, %s45
      %p49 = pneg %p43
      %p50 = scmp.eq.s32.totalorder %s22, 7
      %p51 = por %p49, %p50
      %p52 = scmp.ne.s32.totalorder %s44, %s47
      %p53 = scmp.eq.s32.totalorder %s22, 0
      %p54 = por %p52, %p53
      %p55 = scmp.ne.s32.totalorder %s44, %s47
      %p56 = scmp.eq.s32.totalorder %s27, 7
      %p57 = por %p55, %p56
      %p58 = scmp.ne.s32.totalorder %s47, %s48
      %p59 = scmp.eq.s32.totalorder %s27, 0
      %p60 = por %p58, %p59
      %p61 = scmp.ne.s32.totalorder %s47, %s48
      %p62 = scmp.eq.s32.totalorder %s28, 7
      %p63 = por %p61, %p62
      %p65 = scmp.ne.s32.totalorder %s48, %s64
      %p66 = scmp.eq.s32.totalorder %s28, 0
      %p67 = por %p65, %p66
      %s68 = ssub.s32 %s30, %s37
      %s69 = ssub.s32 %s29, %s41
      %s70 = sor.u32 %s68, %s69
      %p71 = scmp.eq.s32.totalorder %s70, 0
      %s73 = sadd.s32 %s72, 1
      %s74 = scalar_select %p71, %s72, %s73
      %p77 = pneg %p71
      %p78 = scmp.eq.s32.totalorder %s22, 7
      %p79 = por %p77, %p78
      %p80 = scmp.ne.s32.totalorder %s72, %s75
      %p81 = scmp.eq.s32.totalorder %s22, 0
      %p82 = por %p80, %p81
      %p83 = scmp.ne.s32.totalorder %s72, %s75
      %p84 = scmp.eq.s32.totalorder %s27, 7
      %p85 = por %p83, %p84
      %p86 = scmp.ne.s32.totalorder %s75, %s76
      %p87 = scmp.eq.s32.totalorder %s27, 0
      %p88 = por %p86, %p87
      %p89 = scmp.ne.s32.totalorder %s75, %s76
      %p90 = scmp.eq.s32.totalorder %s28, 7
      %p91 = por %p89, %p90
      %p93 = scmp.ne.s32.totalorder %s76, %s92
      %p94 = scmp.eq.s32.totalorder %s28, 0
      %p95 = por %p93, %p94
      %s97 = sadd.s32 %s96, 1
      %p100 = scmp.eq.s32.totalorder %s22, 7
      %p101 = scmp.ne.s32.totalorder %s96, %s98
      %p102 = scmp.eq.s32.totalorder %s22, 0
      %p103 = por %p101, %p102
      %p104 = scmp.ne.s32.totalorder %s96, %s98
      %p105 = scmp.eq.s32.totalorder %s27, 7
      %p106 = por %p104, %p105
      %p107 = scmp.ne.s32.totalorder %s98, %s99
      %p108 = scmp.eq.s32.totalorder %s27, 0
      %p109 = por %p107, %p108
      %p110 = scmp.ne.s32.totalorder %s98, %s99
      %p111 = scmp.eq.s32.totalorder %s28, 7
      %p112 = por %p110, %p111
      %p114 = scmp.ne.s32.totalorder %s99, %s113
      %p115 = scmp.eq.s32.totalorder %s28, 0
      %p116 = por %p114, %p115
      %s118 = sadd.s32 %s117, 1
      %p121 = scmp.eq.s32.totalorder %s22, 7
      %p122 = scmp.ne.s32.totalorder %s117, %s119
      %p123 = scmp.eq.s32.totalorder %s22, 0
      %p124 = por %p122, %p123
      %p125 = scmp.ne.s32.totalorder %s117, %s119
      %p126 = scmp.eq.s32.totalorder %s27, 7
      %p127 = por %p125, %p126
      %p128 = scmp.ne.s32.totalorder %s119, %s120
      %p129 = scmp.eq.s32.totalorder %s27, 0
      %p130 = por %p128, %p129
      %p131 = scmp.ne.s32.totalorder %s119, %s120
      %p132 = scmp.eq.s32.totalorder %s28, 7
      %p133 = por %p131, %p132
      %p135 = scmp.ne.s32.totalorder %s120, %s134
      %p136 = scmp.eq.s32.totalorder %s28, 0
      %p137 = por %p135, %p136
      %s139 = sadd.s32 %s138, 1
      %p142 = scmp.eq.s32.totalorder %s22, 7
      %p143 = scmp.ne.s32.totalorder %s138, %s140
      %p144 = scmp.eq.s32.totalorder %s22, 0
      %p145 = por %p143, %p144
      %p146 = scmp.ne.s32.totalorder %s138, %s140
      %p147 = scmp.eq.s32.totalorder %s27, 7
      %p148 = por %p146, %p147
      %p149 = scmp.ne.s32.totalorder %s140, %s141
      %p150 = scmp.eq.s32.totalorder %s27, 0
      %p151 = por %p149, %p150
      %p152 = scmp.ne.s32.totalorder %s140, %s141
      %p153 = scmp.eq.s32.totalorder %s28, 7
      %p154 = por %p152, %p153
      %p156 = scmp.ne.s32.totalorder %s141, %s155
      %p157 = scmp.eq.s32.totalorder %s28, 0
      %p158 = por %p156, %p157
      %s160 = sadd.s32 %s159, 1
      %p163 = scmp.eq.s32.totalorder %s22, 7
      %p164 = scmp.ne.s32.totalorder %s159, %s161
      %p165 = scmp.eq.s32.totalorder %s22, 0
      %p166 = por %p164, %p165
      %p167 = scmp.ne.s32.totalorder %s159, %s161
      %p168 = scmp.eq.s32.totalorder %s27, 7
      %p169 = por %p167, %p168
      %p170 = scmp.ne.s32.totalorder %s161, %s162
      %p171 = scmp.eq.s32.totalorder %s27, 0
      %p172 = por %p170, %p171
      %p173 = scmp.ne.s32.totalorder %s161, %s162
      %p174 = scmp.eq.s32.totalorder %s28, 7
      %p175 = por %p173, %p174
      %p177 = scmp.ne.s32.totalorder %s162, %s176
      %p178 = scmp.eq.s32.totalorder %s28, 0
      %p179 = por %p177, %p178
      %s180 = ssub.s32 %s30, %s37
      %s181 = ssub.s32 %s29, %s41
      %s182 = sor.u32 %s180, %s181
      %p183 = scmp.eq.s32.totalorder %s182, 0
      %s185 = sadd.s32 %s184, 1
      %s186 = scalar_select %p183, %s184, %s185
      %p189 = pneg %p183
      %p190 = scmp.eq.s32.totalorder %s22, 7
      %p191 = por %p189, %p190
      %p192 = scmp.ne.s32.totalorder %s184, %s187
      %p193 = scmp.eq.s32.totalorder %s22, 0
      %p194 = por %p192, %p193
      %p195 = scmp.ne.s32.totalorder %s184, %s187
      %p196 = scmp.eq.s32.totalorder %s27, 7
      %p197 = por %p195, %p196
      %p198 = scmp.ne.s32.totalorder %s187, %s188
      %p199 = scmp.eq.s32.totalorder %s27, 0
      %p200 = por %p198, %p199
      %p201 = scmp.ne.s32.totalorder %s187, %s188
      %p202 = scmp.eq.s32.totalorder %s28, 7
      %p203 = por %p201, %p202
      %p205 = scmp.ne.s32.totalorder %s188, %s204
      %p206 = scmp.eq.s32.totalorder %s28, 0
      %p207 = por %p205, %p206
      %s208 = ssub.s32 %s29, %s41
      %p209 = scmp.eq.s32.totalorder %s208, 0
      %s211 = sadd.s32 %s210, 1
      %s212 = scalar_select %p209, %s210, %s211
      %p215 = pneg %p209
      %p216 = scmp.eq.s32.totalorder %s22, 7
      %p217 = por %p215, %p216
      %p218 = scmp.ne.s32.totalorder %s210, %s213
      %p219 = scmp.eq.s32.totalorder %s22, 0
      %p220 = por %p218, %p219
      %p221 = scmp.ne.s32.totalorder %s210, %s213
      %p222 = scmp.eq.s32.totalorder %s27, 7
      %p223 = por %p221, %p222
      %p224 = scmp.ne.s32.totalorder %s213, %s214
      %p225 = scmp.eq.s32.totalorder %s27, 0
      %p226 = por %p224, %p225
      %p227 = scmp.ne.s32.totalorder %s213, %s214
      %p228 = scmp.eq.s32.totalorder %s28, 7
      %p229 = por %p227, %p228
      %p231 = scmp.ne.s32.totalorder %s214, %s230
      %p232 = scmp.eq.s32.totalorder %s28, 0
      %p233 = por %p231, %p232
      %p234 = scmp.le.s32.totalorder 1, %s22
      %p235 = scmp.lt.s32.totalorder %s22, 9
      %p236 = pnand %p234, %p235
      %p237 = pneg %p236
      // Predicated region
      $region9: #{tpu_custom_call.1} parent=5 // pred_check
        _
      $region10: #{tpu_custom_call.1} parent=5 // pred_check_branch
        %239 = sbr.rel (%p236) target = $region12
      $region11: #{tpu_custom_call.1} parent=5 // pred_region
        %s240 = ssub.s32 %s22, 1
        // Predicated region
        $region13: #{tpu_custom_call.1} parent=11 // pred_check
          %p241 = pneg %p60
        $region14: #{tpu_custom_call.1} parent=11 // pred_check_branch
          %243 = sbr.rel (%p241) target = $region16
        $region15: #{tpu_custom_call.1} parent=11 // pred_region
          %p244 = scmp.lt.s32.totalorder %s31, 0
          %s245 = scalar_select %p244, %s31, 0
          %s246 = smul.addr %s245, 4
          %s247 = scalar_lea.vmem %s0, %s246
        $region16: #{tpu_custom_call.1} parent=11 // pred_fallthru
          _
        // Predicated region
        $region17: #{tpu_custom_call.1} parent=11 // pred_check
          %p248 = pneg %p109
        $region18: #{tpu_custom_call.1} parent=11 // pred_check_branch
          %250 = sbr.rel (%p248) target = $region20
        $region19: #{tpu_custom_call.1} parent=11 // pred_region
          %s252 = ssub.s32 512, 512
          %253 = vsyncadd [#allocation7], %s252
          %s254 = sshll.u32 [#allocation6], 4
          %s255 = int_to_ptr.vmem [resolvable:$true] %s254
          %260 = dma.hbm_to_vmem [thread:$0]  %s2, 512, %s255, [#allocation7], 128, 128, 8
        $region20: #{tpu_custom_call.1} parent=11 // pred_fallthru
          _
        // Predicated region
        $region21: #{tpu_custom_call.1} parent=11 // pred_check
          %p261 = pneg %p130
        $region22: #{tpu_custom_call.1} parent=11 // pred_check_branch
          %263 = sbr.rel (%p261) target = $region24
        $region23: #{tpu_custom_call.1} parent=11 // pred_region
          %s265 = ssub.s32 512, 512
          %266 = vsyncadd [#allocation7], %s265
          %s267 = sshll.u32 [#allocation8], 4
          %s268 = int_to_ptr.vmem [resolvable:$true] %s267
          %273 = dma.hbm_to_vmem [thread:$0]  %s3, 512, %s268, [#allocation7], 128, 128, 8
        $region24: #{tpu_custom_call.1} parent=11 // pred_fallthru
          _
        // Predicated region
        $region25: #{tpu_custom_call.1} parent=11 // pred_check
          %p274 = pneg %p151
        $region26: #{tpu_custom_call.1} parent=11 // pred_check_branch
          %276 = sbr.rel (%p274) target = $region28
        $region27: #{tpu_custom_call.1} parent=11 // pred_region
          _
        $region28: #{tpu_custom_call.1} parent=11 // pred_fallthru
          _
        // Predicated region
        $region29: #{tpu_custom_call.1} parent=11 // pred_check
          %p277 = pneg %p172
        $region30: #{tpu_custom_call.1} parent=11 // pred_check_branch
          %279 = sbr.rel (%p277) target = $region32
        $region31: #{tpu_custom_call.1} parent=11 // pred_region
          _
        $region32: #{tpu_custom_call.1} parent=11 // pred_fallthru
          _
      $region12: #{tpu_custom_call.1} parent=5 // pred_fallthru
        _
      %p280 = scmp.lt.s32.totalorder %s22, 8
      // Predicated region
      $region33: #{tpu_custom_call.1} parent=5 // pred_check
        %p281 = pneg %p280
      $region34: #{tpu_custom_call.1} parent=5 // pred_check_branch
        %283 = sbr.rel (%p281) target = $region36
      $region35: #{tpu_custom_call.1} parent=5 // pred_region
        // Predicated region
        $region37: #{tpu_custom_call.1} parent=35 // pred_check
          %p284 = pneg %p82
        $region38: #{tpu_custom_call.1} parent=35 // pred_check_branch
          %286 = sbr.rel (%p284) target = $region40
        $region39: #{tpu_custom_call.1} parent=35 // pred_region
          %s287 = sand.u32 %s72, 1
          %s288 = scalar_lea.sflag [#allocation4], %s287
          %s289 = sand.u32 %s72, 1
          %s290 = smul.addr %s289, 4
          %s291 = scalar_lea.vmem [#allocation3], %s290
          %s293 = ssub.s32 64, 64
          %294 = vsyncadd %s288, %s293
          %s295 = sadd.s32 %s29, %s30
          %s296 = smul.addr %s295, 64
          %s297 = scalar_lea.hbm %s1, %s296
          %s299 = sshll.u32 %s291, 4
          %s300 = int_to_ptr.vmem [resolvable:$true] %s299
          %302 = dma.hbm_to_vmem [thread:$0]  %s297, 64, %s300, %s288
        $region40: #{tpu_custom_call.1} parent=35 // pred_fallthru
          _
      $region36: #{tpu_custom_call.1} parent=5 // pred_fallthru
        _
      %p303 = scmp.le.s32.totalorder 1, %s22
      %p304 = scmp.lt.s32.totalorder %s22, 9
      %p305 = pnand %p303, %p304
      %p306 = pneg %p305
      // Predicated region
      $region41: #{tpu_custom_call.1} parent=5 // pred_check
        _
      $region42: #{tpu_custom_call.1} parent=5 // pred_check_branch
        %308 = sbr.rel (%p305) target = $region44
      $region43: #{tpu_custom_call.1} parent=5 // pred_region
        %s309 = ssub.s32 %s22, 1
        %s310 = sand.u32 %s75, 1
        %s311 = scalar_lea.sflag [#allocation4], %s310
        %s312 = sand.u32 %s75, 1
        %s313 = smul.addr %s312, 4
        %s314 = scalar_lea.vmem [#allocation3], %s313
        // Predicated region
        $region45: #{tpu_custom_call.1} parent=43 // pred_check
          %p315 = pneg %p88
        $region46: #{tpu_custom_call.1} parent=43 // pred_check_branch
          %317 = sbr.rel (%p315) target = $region48
        $region47: #{tpu_custom_call.1} parent=43 // pred_region
          %318 = dma.done %s311, 64
        $region48: #{tpu_custom_call.1} parent=43 // pred_fallthru
          _
        // Predicated region
        $region49: #{tpu_custom_call.1} parent=43 // pred_check
          %p319 = pneg %p109
        $region50: #{tpu_custom_call.1} parent=43 // pred_check_branch
          %321 = sbr.rel (%p319) target = $region52
        $region51: #{tpu_custom_call.1} parent=43 // pred_region
          %322 = dma.done [#allocation7], 512
        $region52: #{tpu_custom_call.1} parent=43 // pred_fallthru
          _
        // Predicated region
        $region53: #{tpu_custom_call.1} parent=43 // pred_check
          %p323 = pneg %p130
        $region54: #{tpu_custom_call.1} parent=43 // pred_check_branch
          %325 = sbr.rel (%p323) target = $region56
        $region55: #{tpu_custom_call.1} parent=43 // pred_region
          %326 = dma.done [#allocation7], 512
        $region56: #{tpu_custom_call.1} parent=43 // pred_fallthru
          _
        %p327 = scmp.lt.s32.totalorder %s31, 0
        %s328 = scalar_select %p327, %s31, 0
        %s329 = smul.addr %s328, 4
        %s330 = scalar_lea.vmem %s0, %s329
        %p331 = pneg %p60
        %p332 = pneg %p57
        %s333 = sand.u32 %s75, 1
        %s334 = scalar_lea.sflag [#allocation4], %s333
        %s335 = sand.u32 %s75, 1
        %s336 = smul.addr %s335, 4
        %s337 = scalar_lea.vmem [#allocation3], %s336
        %p338 = pneg %p88
        %p339 = pneg %p85
        %p340 = pneg %p109
        %p341 = pneg %p106
        %p342 = pneg %p130
        %p343 = pneg %p127
        %p344 = pneg %p151
        %p345 = pneg %p148
        %p346 = pneg %p172
        %p347 = pneg %p169
        %p348 = pneg %p200
        %p349 = pneg %p197
        %s350 = sand.u32 %s187, 1
        %s351 = scalar_lea.sflag [#allocation5], %s350
        %s352 = sand.u32 %s187, 1
        %s353 = smul.addr %s352, 4
        %s354 = scalar_lea.vmem [#allocation9], %s353
        %p355 = pneg %p226
        %p356 = pneg %p223
        %p357 = scmp.lt.s32.totalorder %s31, 0
        %s358 = scalar_select %p357, %s31, 0
        %s359 = smul.addr %s358, 4
        %s360 = scalar_lea.vmem %s0, %s359
        %p361 = scmp.eq.s32.totalorder %s32, 0
        // Predicated region
        $region57: #{tpu_custom_call.1} parent=43 // pred_check
          %p362 = pneg %p361
        $region58: #{tpu_custom_call.1} parent=43 // pred_check_branch
          %364 = sbr.rel (%p362) target = $region60
        $region59: #{tpu_custom_call.1} parent=43 // pred_region
          %vm365 = vcmask 257024
          %366 = vst.msk [vmem:[#allocation2] sm:$0xf] %vm365, 0.0
        $region60: #{tpu_custom_call.1} parent=43 // pred_fallthru
          _
        %v367 = vld [vmem:[#allocation2] sm:$0xf]
        %v368 = vld [vmem:[%s314] sm:$0xf]
        %v369 = vld [vmem:[#allocation6] sm:$0xff]
        %v370 = vld [vmem:[#allocation6 + $0x8] sm:$0xff]
        %v371 = vld [vmem:[#allocation6 + $0x10] sm:$0xff]
        %v372 = vld [vmem:[#allocation6 + $0x18] sm:$0xff]
        %v373 = vld [vmem:[%s4] sm:$0x1]
        %v375 = vlaneseq
        %v376 = vshrl.u32 %v375, 7
        %v377 = vsub.s32 0, %v376
        %v378 = vrot.slane %v373, %v377
        %vm380 = vcmask 261120
        %v382 = vsel %vm380, %v368, 0
        %384 = vmatprep.subr.mxu0 0.0
        %385 = vmatpush1.msra.mxu0 0.0
        %386 = vmatprep.subr.mxu0 0.0
        %387 = vmatpush1.msra.mxu0 0.0
        %388 = vmatprep.subr.mxu0 0.0
        %389 = vmatpush1.msra.mxu0 0.0
        %390 = vmatprep.subr.mxu0 0.0
        %391 = vmatpush1.msra.mxu0 0.0
        %392 = vmatprep.subr.mxu0 0.0
        %393 = vmatpush1.msra.mxu0 0.0
        %394 = vmatprep.subr.mxu0 0.0
        %395 = vmatpush1.msra.mxu0 0.0
        %396 = vmatprep.subr.mxu0 0.0
        %397 = vmatpush1.msra.mxu0 0.0
        %398 = vmatprep.subr.mxu0 0.0
        %399 = vmatpush1.msra.mxu0 0.0
        %400 = vmatprep.subr.mxu0 0.0
        %401 = vmatpush1.msra.mxu0 0.0
        %402 = vmatprep.subr.mxu0 0.0
        %403 = vmatpush1.msra.mxu0 0.0
        %404 = vmatprep.subr.mxu0 0.0
        %405 = vmatpush1.msra.mxu0 0.0
        %406 = vmatprep.subr.mxu0 0.0
        %407 = vmatpush1.msra.mxu0 0.0
        %408 = vmatprep.subr.mxu0 0.0
        %409 = vmatpush1.msra.mxu0 %v372
        %410 = vmatprep.subr.mxu0 0.0
        %411 = vmatpush1.msra.mxu0 %v371
        %412 = vmatprep.subr.mxu0 0.0
        %413 = vmatpush1.msra.mxu0 %v370
        %414 = vmatprep.subr.mxu0 0.0
        %415 = vmatpush1.msra.mxu0 %v369
        %416 = vmatprep.subr.mxu0 0.0
        %417 = vmatpush2.msra.mxu0 0.0
        %418 = vmatprep.subr.mxu0 0.0
        %419 = vmatpush2.msra.mxu0 0.0
        %420 = vmatprep.subr.mxu0 0.0
        %421 = vmatpush2.msra.mxu0 0.0
        %422 = vmatprep.subr.mxu0 0.0
        %423 = vmatpush2.msra.mxu0 0.0
        %424 = vmatprep.subr.mxu0 0.0
        %425 = vmatpush2.msra.mxu0 0.0
        %426 = vmatprep.subr.mxu0 0.0
        %427 = vmatpush2.msra.mxu0 0.0
        %428 = vmatprep.subr.mxu0 0.0
        %429 = vmatpush2.msra.mxu0 0.0
        %430 = vmatprep.subr.mxu0 0.0
        %431 = vmatpush2.msra.mxu0 0.0
        %432 = vmatprep.subr.mxu0 0.0
        %433 = vmatpush2.msra.mxu0 0.0
        %434 = vmatprep.subr.mxu0 0.0
        %435 = vmatpush2.msra.mxu0 0.0
        %436 = vmatprep.subr.mxu0 0.0
        %437 = vmatpush2.msra.mxu0 0.0
        %438 = vmatprep.subr.mxu0 0.0
        %439 = vmatpush2.msra.mxu0 0.0
        %440 = vmatprep.subr.mxu0 0.0
        %441 = vmatpush2.msra.mxu0 0.0
        %442 = vmatprep.subr.mxu0 0.0
        %443 = vmatpush2.msra.mxu0 0.0
        %444 = vmatprep.subr.mxu0 0.0
        %445 = vmatpush2.msra.mxu0 0.0
        %446 = vmatprep.subr.mxu0 0.0
        %447 = vmatpush2.msra.mxu0 0.0
        %448 = vmatprep.mubr.f32.mxu0 0.0
        %449 = vmatmul.mubr.f32.gmra.mxu0 %v382
        %v450 = vpop.f32.mrf.mxu0
        %v451 = vadd.f32 %v378, %v450
        %v452 = vpop.f32.mrf.mxu0
        %453 = vdwg.mxu0
        %v454 = vld [vmem:[#allocation8] sm:$0xff]
        %v455 = vld [vmem:[#allocation8 + $0x8] sm:$0xff]
        %v456 = vld [vmem:[#allocation8 + $0x10] sm:$0xff]
        %v457 = vld [vmem:[#allocation8 + $0x18] sm:$0xff]
        %v458 = vld [vmem:[%s5] sm:$0x1]
        %v460 = vlaneseq
        %v461 = vshrl.u32 %v460, 7
        %v462 = vsub.s32 0, %v461
        %v463 = vrot.slane %v458, %v462
        %v466 = vsel %vm380, %v367, 0
        %468 = vmatprep.subr.mxu0 0.0
        %469 = vmatpush1.msra.mxu0 0.0
        %470 = vmatprep.subr.mxu0 0.0
        %471 = vmatpush1.msra.mxu0 0.0
        %472 = vmatprep.subr.mxu0 0.0
        %473 = vmatpush1.msra.mxu0 0.0
        %474 = vmatprep.subr.mxu0 0.0
        %475 = vmatpush1.msra.mxu0 0.0
        %476 = vmatprep.subr.mxu0 0.0
        %477 = vmatpush1.msra.mxu0 0.0
        %478 = vmatprep.subr.mxu0 0.0
        %479 = vmatpush1.msra.mxu0 0.0
        %480 = vmatprep.subr.mxu0 0.0
        %481 = vmatpush1.msra.mxu0 0.0
        %482 = vmatprep.subr.mxu0 0.0
        %483 = vmatpush1.msra.mxu0 0.0
        %484 = vmatprep.subr.mxu0 0.0
        %485 = vmatpush1.msra.mxu0 0.0
        %486 = vmatprep.subr.mxu0 0.0
        %487 = vmatpush1.msra.mxu0 0.0
        %488 = vmatprep.subr.mxu0 0.0
        %489 = vmatpush1.msra.mxu0 0.0
        %490 = vmatprep.subr.mxu0 0.0
        %491 = vmatpush1.msra.mxu0 0.0
        %492 = vmatprep.subr.mxu0 0.0
        %493 = vmatpush1.msra.mxu0 %v457
        %494 = vmatprep.subr.mxu0 0.0
        %495 = vmatpush1.msra.mxu0 %v456
        %496 = vmatprep.subr.mxu0 0.0
        %497 = vmatpush1.msra.mxu0 %v455
        %498 = vmatprep.subr.mxu0 0.0
        %499 = vmatpush1.msra.mxu0 %v454
        %500 = vmatprep.subr.mxu0 0.0
        %501 = vmatpush2.msra.mxu0 0.0
        %502 = vmatprep.subr.mxu0 0.0
        %503 = vmatpush2.msra.mxu0 0.0
        %504 = vmatprep.subr.mxu0 0.0
        %505 = vmatpush2.msra.mxu0 0.0
        %506 = vmatprep.subr.mxu0 0.0
        %507 = vmatpush2.msra.mxu0 0.0
        %508 = vmatprep.subr.mxu0 0.0
        %509 = vmatpush2.msra.mxu0 0.0
        %510 = vmatprep.subr.mxu0 0.0
        %511 = vmatpush2.msra.mxu0 0.0
        %512 = vmatprep.subr.mxu0 0.0
        %513 = vmatpush2.msra.mxu0 0.0
        %514 = vmatprep.subr.mxu0 0.0
        %515 = vmatpush2.msra.mxu0 0.0
        %516 = vmatprep.subr.mxu0 0.0
        %517 = vmatpush2.msra.mxu0 0.0
        %518 = vmatprep.subr.mxu0 0.0
        %519 = vmatpush2.msra.mxu0 0.0
        %520 = vmatprep.subr.mxu0 0.0
        %521 = vmatpush2.msra.mxu0 0.0
        %522 = vmatprep.subr.mxu0 0.0
        %523 = vmatpush2.msra.mxu0 0.0
        %524 = vmatprep.subr.mxu0 0.0
        %525 = vmatpush2.msra.mxu0 0.0
        %526 = vmatprep.subr.mxu0 0.0
        %527 = vmatpush2.msra.mxu0 0.0
        %528 = vmatprep.subr.mxu0 0.0
        %529 = vmatpush2.msra.mxu0 0.0
        %530 = vmatprep.subr.mxu0 0.0
        %531 = vmatpush2.msra.mxu0 0.0
        %532 = vmatprep.mubr.f32.mxu0 0.0
        %533 = vmatmul.mubr.f32.gmra.mxu0 %v466
        %v534 = vpop.f32.mrf.mxu0
        %v535 = vadd.f32 %v463, %v534
        %v536 = vpop.f32.mrf.mxu0
        %537 = vdwg.mxu0
        %v538 = vadd.f32 %v451, %v535
        %v539 = vxor.u32 %v538, 2147483648
        %v540 = vmul.f32 %v539, 1.442695
        %v541 = vpow.pop %v540
        %v542 = vadd.f32 %v541, 1.0
        %v543 = vrcp.pop %v542
        %v544 = vmul.f32 1.0, %v543
        %546 = vrot.lane.b32.xlu0 %v535, 64
        %v547 = vpop.permute.xlu0 %546
        %v549 = vmul.f32 %v544, %v547
        %551 = vrot.lane.b32.xlu0 %v549, 64
        %v552 = vpop.permute.xlu0 %551
        %v554 = vadd.f32 %v451, %v552
        %v555 = vtanh.pop %v554
        %v556 = vsub.f32 1.0, %v544
        %558 = vrot.lane.b32.xlu0 %v555, 96
        %v559 = vpop.permute.xlu0 %558
        %v561 = vmul.f32 %v556, %v559
        %562 = vrot.lane.b32.xlu0 %v367, 32
        %v563 = vpop.permute.xlu0 %562
        %v565 = vmul.f32 %v544, %v563
        %v566 = vadd.f32 %v561, %v565
        %v567 = vld [vmem:[%s360] sm:$0xf]
        %v568 = vstv %s32
        %vm569 = vcmp.lt.s32.totalorder %v568, %v567
        %v570 = vsel %vm569, 1, 0
        %v571 = vcvt.s32.f32 %v570
        %573 = vset.pattern.permute.xlu0 0
        %574 = vperm.xlu0 %573, %v571
        %v575 = vpop.permute.xlu0 %574
        %v577 = vmul.f32 %v575, %v566
        %v578 = vsub.f32 1.0, %v571
        %580 = vset.pattern.permute.xlu0 0
        %581 = vperm.xlu0 %580, %v578
        %v582 = vpop.permute.xlu0 %581
        %v584 = vmul.f32 %v582, %v367
        %586 = vrot.lane.b32.xlu0 %v584, 32
        %v587 = vpop.permute.xlu0 %586
        %v589 = vadd.f32 %v577, %v587
        %591 = vrot.lane.b32.xlu0 %v589, 96
        %v592 = vpop.permute.xlu0 %591
        %vm594 = vcmask 257024
        %595 = vst.msk [vmem:[#allocation2] sm:$0xf] %vm594, %v592
        %597 = vrot.lane.b32.xlu0 %v577, 96
        %v598 = vpop.permute.xlu0 %597
        %600 = vst.msk [vmem:[%s354] sm:$0xf] %vm594, %v598
        %p601 = scmp.eq.s32.totalorder %s32, 7
        // Predicated region
        $region61: #{tpu_custom_call.1} parent=43 // pred_check
          %p602 = pneg %p601
        $region62: #{tpu_custom_call.1} parent=43 // pred_check_branch
          %604 = sbr.rel (%p602) target = $region64
        $region63: #{tpu_custom_call.1} parent=43 // pred_region
          %605 = vst.msk [vmem:[#allocation10] sm:$0xf] %vm594, %v592
        $region64: #{tpu_custom_call.1} parent=43 // pred_fallthru
          _
        %s606 = sand.u32 %s187, 1
        %s607 = scalar_lea.sflag [#allocation5], %s606
        %s608 = sand.u32 %s187, 1
        %s609 = smul.addr %s608, 4
        %s610 = scalar_lea.vmem [#allocation9], %s609
        // Predicated region
        $region65: #{tpu_custom_call.1} parent=43 // pred_check
          %p611 = pneg %p197
        $region66: #{tpu_custom_call.1} parent=43 // pred_check_branch
          %613 = sbr.rel (%p611) target = $region68
        $region67: #{tpu_custom_call.1} parent=43 // pred_region
          %s615 = ssub.s32 64, 64
          %616 = vsyncadd %s607, %s615
          %s617 = sadd.s32 %s31, %s32
          %s618 = smul.addr %s617, 64
          %s619 = scalar_lea.hbm %s6, %s618
          %s621 = sshll.u32 %s610, 4
          %s622 = int_to_ptr.vmem [resolvable:$true] %s621
          %624 = dma.vmem_to_hbm [thread:$0]  %s622, 64, %s619, %s607
        $region68: #{tpu_custom_call.1} parent=43 // pred_fallthru
          _
        // Predicated region
        $region69: #{tpu_custom_call.1} parent=43 // pred_check
          %p625 = pneg %p223
        $region70: #{tpu_custom_call.1} parent=43 // pred_check_branch
          %627 = sbr.rel (%p625) target = $region72
        $region71: #{tpu_custom_call.1} parent=43 // pred_region
          %s629 = ssub.s32 64, 64
          %630 = vsyncadd [#allocation11], %s629
          %s631 = smul.addr %s31, 64
          %s632 = scalar_lea.hbm %s7, %s631
          %s634 = sshll.u32 [#allocation10], 4
          %s635 = int_to_ptr.vmem [resolvable:$true] %s634
          %637 = dma.vmem_to_hbm [thread:$0]  %s635, 64, %s632, [#allocation11]
        $region72: #{tpu_custom_call.1} parent=43 // pred_fallthru
          _
        // Predicated region
        $region73: #{tpu_custom_call.1} parent=43 // pred_check
          %p638 = pneg %p223
        $region74: #{tpu_custom_call.1} parent=43 // pred_check_branch
          %640 = sbr.rel (%p638) target = $region76
        $region75: #{tpu_custom_call.1} parent=43 // pred_region
          %641 = dma.done [#allocation11], 64
        $region76: #{tpu_custom_call.1} parent=43 // pred_fallthru
          _
      $region44: #{tpu_custom_call.1} parent=5 // pred_fallthru
        _
      %p642 = scmp.le.s32.totalorder 2, %s22
      // Predicated region
      $region77: #{tpu_custom_call.1} parent=5 // pred_check
        %p643 = pneg %p642
      $region78: #{tpu_custom_call.1} parent=5 // pred_check_branch
        %645 = sbr.rel (%p643) target = $region80
      $region79: #{tpu_custom_call.1} parent=5 // pred_region
        %s646 = ssub.s32 %s22, 2
        // Predicated region
        $region81: #{tpu_custom_call.1} parent=79 // pred_check
          %p647 = pneg %p203
        $region82: #{tpu_custom_call.1} parent=79 // pred_check_branch
          %649 = sbr.rel (%p647) target = $region84
        $region83: #{tpu_custom_call.1} parent=79 // pred_region
          %s650 = sand.u32 %s188, 1
          %s651 = scalar_lea.sflag [#allocation5], %s650
          %s652 = sand.u32 %s188, 1
          %s653 = smul.addr %s652, 4
          %s654 = scalar_lea.vmem [#allocation9], %s653
          %655 = dma.done %s651, 64
        $region84: #{tpu_custom_call.1} parent=79 // pred_fallthru
          _
      $region80: #{tpu_custom_call.1} parent=5 // pred_fallthru
        _
    $region6: #{tpu_custom_call.1} parent=1 // loop_footer
      %s26 = sadd.s32 1, %s22
    $region7: #{tpu_custom_call.1} parent=1 // loop_footer_branch
      %21 = sbr.rel target = $region3
    $region8: #{tpu_custom_call.1} parent=1 // loop_exit
      _
    %656 = vsyncpa [#allocation4], 1
    %s657 = scalar_lea.sflag [#allocation4], 1
    %658 = vsyncpa %s657, 1
    %659 = vsyncpa [#allocation7], 1
    %660 = vsyncpa [#allocation5], 1
    %s661 = scalar_lea.sflag [#allocation5], 1
    %662 = vsyncpa %s661, 1
    %663 = vsyncpa [#allocation11], 1

</llo_original>
